<compile_context>
chip_gen: v6e
topology: v6e:2x2x1
jax: 0.10.0
libtpu: 0.0.40
codegen_flags: <defaults>
</compile_context>

<pallas_src>
import numpy as np
import jax
import jax.numpy as jnp
from jax import lax
from jax.experimental import pallas as pl
from jax.experimental.pallas import tpu as pltpu

BN_EPS = 1e-5
INV_SQRT2 = 0.7071067811865476


# --------------------------------------------------------------------------- #
# Kernels
# --------------------------------------------------------------------------- #
def _conv_stats_kernel(a_ref, w_ref, stats_ref):
    # a: (tm, 9*Cin) bf16 | w: (9*Cin, Cpad) bf16 | stats: (1, 2, Cpad) f32
    y = jnp.dot(a_ref[...], w_ref[...], preferred_element_type=jnp.float32)
    s1 = jnp.sum(y, axis=0, keepdims=True)
    s2 = jnp.sum(y * y, axis=0, keepdims=True)
    stats_ref[...] = jnp.concatenate([s1, s2], axis=0)[None, :, :]


def _conv_y_stats_kernel(a_ref, w_ref, y_ref, stats_ref):
    # Same, but also stores the pre-BN conv tile (single-A-read path).
    y = jnp.dot(a_ref[...], w_ref[...], preferred_element_type=jnp.float32)
    y_ref[...] = y
    s1 = jnp.sum(y, axis=0, keepdims=True)
    s2 = jnp.sum(y * y, axis=0, keepdims=True)
    stats_ref[...] = jnp.concatenate([s1, s2], axis=0)[None, :, :]


def _conv_bn_gelu_kernel(a_ref, w_ref, scale_ref, shift_ref, o_ref):
    # Recompute the conv tile, then BN folded into one FMA + exact GELU (erf).
    y = jnp.dot(a_ref[...], w_ref[...], preferred_element_type=jnp.float32)
    z = y * scale_ref[...] + shift_ref[...]
    o_ref[...] = 0.5 * z * (1.0 + lax.erf(z * INV_SQRT2))


def _bn_gelu_kernel(y_ref, scale_ref, shift_ref, o_ref):
    # Round-trip path: pre-BN conv output already in HBM; only BN + GELU.
    z = y_ref[...] * scale_ref[...] + shift_ref[...]
    o_ref[...] = 0.5 * z * (1.0 + lax.erf(z * INV_SQRT2))


# --------------------------------------------------------------------------- #
# Tiling / weight helpers
# --------------------------------------------------------------------------- #
def _round_up(x, m):
    return -(-x // m) * m


def _pick_tiling(m, row_bytes, w_bytes):
    """Pick (tm, T, Mpad): rows per tile, grid steps, padded row count.

    Budget: double-buffered (A tile + y/out tile) plus the double-buffered
    resident block weight stay around ~20 MiB — inside the v7x scoped-VMEM
    default (32 MiB; 64 MiB physical) and far inside v5e/v6e.  tm is a
    multiple of 16 (bf16 sublane packing); the grid always has >= 4 steps and
    an even step count so both v7x TensorCores stay busy under
    dimension_semantics=("parallel",).
    """
    total_budget = 20 << 20
    per_buf = max(1 << 20, (total_budget - 2 * w_bytes) // 2)
    tm_cap = max(16, (per_buf // max(row_bytes, 1)) // 16 * 16)
    t = max(4, pl.cdiv(m, tm_cap))
    if t % 2:
        t += 1
    tm = max(16, _round_up(pl.cdiv(m, t), 16))
    t = pl.cdiv(m, tm)
    if t % 2:
        t += 1
    return tm, t, tm * t


def _compiler_params(vmem_estimate_bytes):
    # Explicit scoped-VMEM limit: >= 32 MiB so v5e's 16 MiB default never
    # constrains the tiles picked above; capped well under v7x's 64 MiB.
    limit = int(min(max(2 * vmem_estimate_bytes, 32 << 20), 56 << 20))
    return pltpu.CompilerParams(dimension_semantics=("parallel",),
                                vmem_limit_bytes=limit)


def _build_block_weight(w_pt, cpad):
    """(Cin, Cout, 4, 4) ConvTranspose2d weight -> (9*Cin, cpad) block matrix.

    Rows: 9 im2col offsets (oy, ox) x Cin.  Cols: 4 output parities (py, px)
    x Cout, zero-padded to cpad (multiple of 128) for lane-dense stores.
    Taps that do not contribute to a parity stay zero.
    """
    cin, cout = w_pt.shape[0], w_pt.shape[1]
    wb = jnp.zeros((9 * cin, cpad), jnp.float32)
    for py in range(2):
        for px in range(2):
            col = (py * 2 + px) * cout
            for dy in range(2):
                for dx in range(2):
                    row = ((py + dy) * 3 + (px + dx)) * cin
                    tap = w_pt[:, :, 3 - py - 2 * dy, 3 - px - 2 * dx]
                    wb = wb.at[row:row + cin, col:col + cout].set(
                        tap.astype(jnp.float32))
    return wb


# --------------------------------------------------------------------------- #
# Wrapper
# --------------------------------------------------------------------------- #
def upconv_forward(x_nchw, w_pt, b, gamma, beta):
    """UpConv forward: (N, Cin, H, W) -> (N, Cout, 2H, 2W).

    `b` (ConvTranspose2d bias) is accepted for interface parity but unused: a
    per-channel constant cancels exactly under training-mode BatchNorm.
    """
    del b  # TODO(synk): re-add bias if ever reused with eval-mode (running-stats) BN.
    N, Cin, H, W = x_nchw.shape
    Cout = w_pt.shape[1]
    M = N * H * W
    K = 9 * Cin
    C4 = 4 * Cout
    Cpad = _round_up(C4, 128)          # lane-dense output columns

    # glue: NHWC + zero pad + deduplicated 9-offset im2col slab, in bf16.
    x = jnp.transpose(x_nchw, (0, 2, 3, 1)).astype(jnp.float32)
    xpad = jnp.pad(x, ((0, 0), (1, 1), (1, 1), (0, 0)))
    slabs = [xpad[:, oy:oy + H, ox:ox + W, :]
             for oy in range(3) for ox in range(3)]
    a = jnp.concatenate(slabs, axis=-1).reshape(M, K).astype(jnp.bfloat16)

    wblk = _build_block_weight(w_pt, Cpad).astype(jnp.bfloat16)

    a_row_bytes = K * 2                # bf16 im2col row
    y_row_bytes = Cpad * 4             # f32 conv / output row
    w_bytes = K * Cpad * 2
    tm, T, Mpad = _pick_tiling(M, a_row_bytes + 2 * y_row_bytes, w_bytes)
    if Mpad != M:                      # zero rows contribute 0 to the BN sums
        a = jnp.pad(a, ((0, Mpad - M), (0, 0)))

    vmem_est = 2 * tm * (a_row_bytes + 2 * y_row_bytes) + 2 * w_bytes
    params = _compiler_params(vmem_est)

    # Single-A-read (y round trip) wins when re-reading A costs more than
    # writing + re-reading the f32 conv output.
    use_roundtrip = a_row_bytes > 2 * y_row_bytes

    a_spec = pl.BlockSpec((tm, K), lambda i: (i, 0))
    w_spec = pl.BlockSpec((K, Cpad), lambda i: (0, 0))
    vec_spec = pl.BlockSpec((1, Cpad), lambda i: (0, 0))
    row_spec = pl.BlockSpec((tm, Cpad), lambda i: (i, 0))
    stats_spec = pl.BlockSpec((1, 2, Cpad), lambda i: (i, 0, 0))
    stats_shape = jax.ShapeDtypeStruct((T, 2, Cpad), jnp.float32)

    # --- pass 1: conv + per-tile per-column sum / sum-of-squares partials --- #
    if use_roundtrip:
        y_conv, stats = pl.pallas_call(
            _conv_y_stats_kernel,
            out_shape=(jax.ShapeDtypeStruct((Mpad, Cpad), jnp.float32),
                       stats_shape),
            grid=(T,),
            in_specs=[a_spec, w_spec],
            out_specs=(row_spec, stats_spec),
            compiler_params=params,
        )(a, wblk)
    else:
        stats = pl.pallas_call(
            _conv_stats_kernel,
            out_shape=stats_shape,
            grid=(T,),
            in_specs=[a_spec, w_spec],
            out_specs=stats_spec,
            compiler_params=params,
        )(a, wblk)

    # --- tiny finalize: fold training-mode BN into per-channel scale/shift -- #
    tot = jnp.sum(stats, axis=0)                     # (2, Cpad)
    cnt = jnp.float32(4 * M)                         # = N * 2H * 2W (true count)
    mean = jnp.sum(tot[0, :C4].reshape(4, Cout), axis=0) / cnt
    ex2 = jnp.sum(tot[1, :C4].reshape(4, Cout), axis=0) / cnt
    # E[y^2] - mean^2 in f32 with a guard; fine here since the conv output is
    # near zero-mean (bias folded out).  Use a shifted sum if |mean| >> std.
    var = jnp.maximum(ex2 - mean * mean, 0.0)
    scale_c = gamma.astype(jnp.float32) * lax.rsqrt(var + BN_EPS)
    shift_c = beta.astype(jnp.float32) - mean * scale_c
    scale4 = jnp.pad(jnp.tile(scale_c, 4), (0, Cpad - C4)).reshape(1, Cpad)
    shift4 = jnp.pad(jnp.tile(shift_c, 4), (0, Cpad - C4)).reshape(1, Cpad)

    # --- pass 2: folded BN + exact GELU (conv recomputed or y re-read) ------ #
    if use_roundtrip:
        y_flat = pl.pallas_call(
            _bn_gelu_kernel,
            out_shape=jax.ShapeDtypeStruct((Mpad, Cpad), jnp.float32),
            grid=(T,),
            in_specs=[row_spec, vec_spec, vec_spec],
            out_specs=row_spec,
            compiler_params=params,
        )(y_conv, scale4, shift4)
    else:
        y_flat = pl.pallas_call(
            _conv_bn_gelu_kernel,
            out_shape=jax.ShapeDtypeStruct((Mpad, Cpad), jnp.float32),
            grid=(T,),
            in_specs=[a_spec, w_spec, vec_spec, vec_spec],
            out_specs=row_spec,
            compiler_params=params,
        )(a, wblk, scale4, shift4)

    # Single output permutation: (n,i,j,py,px,c) -> NCHW (n,c,2i+py,2j+px).
    y = y_flat[:M, :C4].reshape(N, H, W, 2, 2, Cout)
    y = jnp.transpose(y, (0, 5, 1, 3, 2, 4))
    return y.reshape(N, Cout, 2 * H, 2 * W)


# --------------------------------------------------------------------------- #
# Pure-JAX reference (lhs-dilated conv == ConvTranspose2d(k=4, s=2, p=1))
# --------------------------------------------------------------------------- #
def upconv_reference(x_nchw, w_pt, b, gamma, beta):
    x = jnp.transpose(x_nchw, (0, 2, 3, 1))
    rhs = jnp.transpose(w_pt[:, :, ::-1, ::-1], (2, 3, 0, 1))  # (kh, kw, Cin, Cout)
    y = lax.conv_general_dilated(
        x, rhs, window_strides=(1, 1), padding=((2, 2), (2, 2)),
        lhs_dilation=(2, 2), rhs_dilation=(1, 1),
        dimension_numbers=("NHWC", "HWIO", "NHWC"))
    y = y + b
    mean = jnp.mean(y, axis=(0, 1, 2), keepdims=True)
    var = jnp.mean((y - mean) ** 2, axis=(0, 1, 2), keepdims=True)
    z = (y - mean) / jnp.sqrt(var + BN_EPS) * gamma + beta
    z = jax.nn.gelu(z, approximate=False)
    return jnp.transpose(z, (0, 3, 1, 2))


if __name__ == "__main__":
    def _check(key, n, cin, cout, h, w):
        kx, kw, kb, kg, kbe = jax.random.split(key, 5)
        x = jax.random.normal(kx, (n, cin, h, w), dtype=jnp.float32)
        # PyTorch ConvTranspose2d weight layout: (in_channels, out_channels, kH, kW)
        w_pt = 0.1 * jax.random.normal(kw, (cin, cout, 4, 4), dtype=jnp.float32)
        b = 0.1 * jax.random.normal(kb, (cout,), dtype=jnp.float32)
        gamma = 1.0 + 0.1 * jax.random.normal(kg, (cout,), dtype=jnp.float32)
        beta = 0.05 * jax.random.normal(kbe, (cout,), dtype=jnp.float32)
        out = jax.block_until_ready(jax.jit(upconv_forward)(x, w_pt, b, gamma, beta))
        ref = jax.block_until_ready(upconv_reference(x, w_pt, b, gamma, beta))
        assert out.shape == (n, cout, 2 * h, 2 * w), out.shape
        # bf16 MXU inputs with f32 accumulation: a few e-3 worst-case post-BN error.
        np.testing.assert_allclose(np.asarray(out), np.asarray(ref),
                                   rtol=2e-2, atol=2e-2)

    key = jax.random.PRNGKey(0)
    k1, k2 = jax.random.split(key)
    _check(k1, 2, 4, 8, 16, 16)   # primary shape (conv-recompute path)
    _check(k2, 1, 64, 16, 8, 8)   # large-Cin shape (single-A-read / y round trip)
    print("KERNEL_OK")
</pallas_src>

<mosaic_0001>
module attributes {stable_mosaic.version = 11 : i64} {
  func.func @_conv_stats_kernel(%arg0: i32, %arg1: memref<128x36xbf16, #tpu.memory_space<vmem>>, %arg2: memref<36x128xbf16, #tpu.memory_space<vmem>>, %arg3: memref<1x2x128xf32, #tpu.memory_space<vmem>>) attributes {dimension_semantics = [#tpu.dimension_semantics<parallel>], iteration_bounds = array<i64: 4>, scalar_prefetch = 0 : i64, scratch_operands = 0 : i64, tpu.core_type = #tpu.core_type<tc>, window_params = [{transform_indices = @transform_0, window_bounds = array<i64: 128, 36>}, {pipeline_mode = #tpu.pipeline_mode<synchronous>, transform_indices = @transform_1, window_bounds = array<i64: 36, 128>}, {transform_indices = @transform_2, window_bounds = array<i64: 1, 2, 128>}]} {
    %c0 = arith.constant 0 : index
    %c0_0 = arith.constant 0 : index
    %0 = vector.load %arg1[%c0, %c0_0] : memref<128x36xbf16, #tpu.memory_space<vmem>>, vector<128x36xbf16>
    %c0_1 = arith.constant 0 : index
    %c0_2 = arith.constant 0 : index
    %1 = vector.load %arg2[%c0_1, %c0_2] : memref<36x128xbf16, #tpu.memory_space<vmem>>, vector<36x128xbf16>
    %cst = arith.constant dense<0.000000e+00> : vector<128x128xf32>
    %2 = tpu.matmul %0, %1, %cst {dimension_numbers = #tpu.dot_dimension_numbers<[1], [0], [0], [1], [0, 0, 1, 1], [], []>} : vector<128x36xbf16>, vector<36x128xbf16>, vector<128x128xf32> -> vector<128x128xf32>
    %cst_3 = arith.constant dense<0.000000e+00> : vector<128xf32>
    %3 = vector.multi_reduction <add>, %2, %cst_3 [0] : vector<128x128xf32> to vector<128xf32>
    %4 = vector.shape_cast %3 : vector<128xf32> to vector<1x128xf32>
    %5 = arith.mulf %2, %2 : vector<128x128xf32>
    %cst_4 = arith.constant dense<0.000000e+00> : vector<128xf32>
    %6 = vector.multi_reduction <add>, %5, %cst_4 [0] : vector<128x128xf32> to vector<128xf32>
    %7 = vector.shape_cast %6 : vector<128xf32> to vector<1x128xf32>
    %8 = tpu.concatenate %4, %7 in 0 : vector<1x128xf32>, vector<1x128xf32> -> vector<2x128xf32>
    %9 = vector.shape_cast %8 : vector<2x128xf32> to vector<1x2x128xf32>
    %c0_5 = arith.constant 0 : index
    %c0_6 = arith.constant 0 : index
    %c0_7 = arith.constant 0 : index
    %10 = vector.load %arg3[%c0_5, %c0_6, %c0_7] : memref<1x2x128xf32, #tpu.memory_space<vmem>>, vector<1x2x128xf32>
    tpu.vector_store %arg3[%c0_5, %c0_6, %c0_7], %9 {strides = array<i32>} : memref<1x2x128xf32, #tpu.memory_space<vmem>>, vector<1x2x128xf32>,
    return
  }
  func.func @transform_0(%arg0: i32) -> (i32, i32) {
    %c0_i32 = arith.constant 0 : i32
    %c0_i32_0 = arith.constant 0 : i32
    return %arg0, %c0_i32 : i32, i32
  }
  func.func @transform_1(%arg0: i32) -> (i32, i32) {
    %c0_i32 = arith.constant 0 : i32
    %c0_i32_0 = arith.constant 0 : i32
    %c0_i32_1 = arith.constant 0 : i32
    return %c0_i32, %c0_i32_0 : i32, i32
  }
  func.func @transform_2(%arg0: i32) -> (i32, i32, i32) {
    %c0_i32 = arith.constant 0 : i32
    %c0_i32_0 = arith.constant 0 : i32
    %c0_i32_1 = arith.constant 0 : i32
    return %arg0, %c0_i32, %c0_i32_0 : i32, i32, i32
  }
}

module attributes {stable_mosaic.version = 11 : i64} {
  func.func @_conv_bn_gelu_kernel(%arg0: i32, %arg1: memref<128x36xbf16, #tpu.memory_space<vmem>>, %arg2: memref<36x128xbf16, #tpu.memory_space<vmem>>, %arg3: memref<1x128xf32, #tpu.memory_space<vmem>>, %arg4: memref<1x128xf32, #tpu.memory_space<vmem>>, %arg5: memref<128x128xf32, #tpu.memory_space<vmem>>) attributes {dimension_semantics = [#tpu.dimension_semantics<parallel>], iteration_bounds = array<i64: 4>, scalar_prefetch = 0 : i64, scratch_operands = 0 : i64, tpu.core_type = #tpu.core_type<tc>, window_params = [{transform_indices = @transform_0, window_bounds = array<i64: 128, 36>}, {pipeline_mode = #tpu.pipeline_mode<synchronous>, transform_indices = @transform_1, window_bounds = array<i64: 36, 128>}, {pipeline_mode = #tpu.pipeline_mode<synchronous>, transform_indices = @transform_2, window_bounds = array<i64: 1, 128>}, {pipeline_mode = #tpu.pipeline_mode<synchronous>, transform_indices = @transform_3, window_bounds = array<i64: 1, 128>}, {transform_indices = @transform_4, window_bounds = array<i64: 128, 128>}]} {
    %c0 = arith.constant 0 : index
    %c0_0 = arith.constant 0 : index
    %0 = vector.load %arg1[%c0, %c0_0] : memref<128x36xbf16, #tpu.memory_space<vmem>>, vector<128x36xbf16>
    %c0_1 = arith.constant 0 : index
    %c0_2 = arith.constant 0 : index
    %1 = vector.load %arg2[%c0_1, %c0_2] : memref<36x128xbf16, #tpu.memory_space<vmem>>, vector<36x128xbf16>
    %cst = arith.constant dense<0.000000e+00> : vector<128x128xf32>
    %2 = tpu.matmul %0, %1, %cst {dimension_numbers = #tpu.dot_dimension_numbers<[1], [0], [0], [1], [0, 0, 1, 1], [], []>} : vector<128x36xbf16>, vector<36x128xbf16>, vector<128x128xf32> -> vector<128x128xf32>
    %c0_3 = arith.constant 0 : index
    %c0_4 = arith.constant 0 : index
    %3 = vector.load %arg3[%c0_3, %c0_4] : memref<1x128xf32, #tpu.memory_space<vmem>>, vector<1x128xf32>
    %4 = vector.broadcast %3 : vector<1x128xf32> to vector<128x128xf32>
    %5 = arith.mulf %2, %4 : vector<128x128xf32>
    %c0_5 = arith.constant 0 : index
    %c0_6 = arith.constant 0 : index
    %6 = vector.load %arg4[%c0_5, %c0_6] : memref<1x128xf32, #tpu.memory_space<vmem>>, vector<1x128xf32>
    %7 = vector.broadcast %6 : vector<1x128xf32> to vector<128x128xf32>
    %8 = arith.addf %5, %7 : vector<128x128xf32>
    %cst_7 = arith.constant 5.000000e-01 : f32
    %9 = vector.broadcast %cst_7 : f32 to vector<128x128xf32>
    %10 = arith.mulf %9, %8 : vector<128x128xf32>
    %cst_8 = arith.constant 0.707106769 : f32
    %11 = vector.broadcast %cst_8 : f32 to vector<128x128xf32>
    %12 = arith.mulf %8, %11 : vector<128x128xf32>
    %13 = math.erf %12 : vector<128x128xf32>
    %cst_9 = arith.constant 1.000000e+00 : f32
    %14 = vector.broadcast %cst_9 : f32 to vector<128x128xf32>
    %15 = arith.addf %14, %13 : vector<128x128xf32>
    %16 = arith.mulf %10, %15 : vector<128x128xf32>
    %c0_10 = arith.constant 0 : index
    %c0_11 = arith.constant 0 : index
    %17 = vector.load %arg5[%c0_10, %c0_11] : memref<128x128xf32, #tpu.memory_space<vmem>>, vector<128x128xf32>
    tpu.vector_store %arg5[%c0_10, %c0_11], %16 {strides = array<i32>} : memref<128x128xf32, #tpu.memory_space<vmem>>, vector<128x128xf32>,
    return
  }
  func.func @transform_0(%arg0: i32) -> (i32, i32) {
    %c0_i32 = arith.constant 0 : i32
    %c0_i32_0 = arith.constant 0 : i32
    return %arg0, %c0_i32 : i32, i32
  }
  func.func @transform_1(%arg0: i32) -> (i32, i32) {
    %c0_i32 = arith.constant 0 : i32
    %c0_i32_0 = arith.constant 0 : i32
    %c0_i32_1 = arith.constant 0 : i32
    return %c0_i32, %c0_i32_0 : i32, i32
  }
  func.func @transform_2(%arg0: i32) -> (i32, i32) {
    %c0_i32 = arith.constant 0 : i32
    %c0_i32_0 = arith.constant 0 : i32
    %c0_i32_1 = arith.constant 0 : i32
    return %c0_i32, %c0_i32_0 : i32, i32
  }
  func.func @transform_3(%arg0: i32) -> (i32, i32) {
    %c0_i32 = arith.constant 0 : i32
    %c0_i32_0 = arith.constant 0 : i32
    %c0_i32_1 = arith.constant 0 : i32
    return %c0_i32, %c0_i32_0 : i32, i32
  }
  func.func @transform_4(%arg0: i32) -> (i32, i32) {
    %c0_i32 = arith.constant 0 : i32
    %c0_i32_0 = arith.constant 0 : i32
    return %arg0, %c0_i32 : i32, i32
  }
}

</mosaic_0001>

<llo_original>
// kernel: squeeze.34
$region0: #{squeeze.34}
  %s0 = inlined_call_operand.vmem [shape: f32[32], index: 0, kind: input, shape index: {}]
  %s1 = inlined_call_operand.vmem [shape: f32[4,8], index: 1, kind: output, shape index: {}]
  $region1: #{squeeze.34} parent=0
    #allocation0 [shape = 'u8[4096]{0}', space=vmem, size = 0x1000, scoped, tag = 'scoped mem for output reshape']
    #allocation1 [shape = 'u8[4096]{0}', space=vmem, size = 0x1000, scoped, tag = 'scoped mem for input reshape']
    %s3 = sshll.u32 1, 1
    %s4 = ssub.s32 %s3, 1
    %v5 = vld [vmem:[%s0] sm:%s4]
    %6 = vst [vmem:[#allocation1] sm:%s4] %v5
    %v7 = vld [vmem:[#allocation1] sm:$0x1]
    %vm8 = vcmask 64512
    %9 = vst.msk [vmem:[#allocation0] sm:$0x1] %vm8, %v7
    %v10 = vld [vmem:[#allocation1] sm:$0x1]
    %11 = vrot.lane.b32.xlu0 %v10, 120
    %v12 = vpop.permute.xlu0 %11
    %vm13 = vcmask 64512
    %s14 = scalar_lea.vmem [#allocation0], 1
    %15 = vst.msk [vmem:[%s14] sm:$0x1] %vm13, %v12
    %v16 = vld [vmem:[#allocation1] sm:$0x1]
    %17 = vrot.lane.b32.xlu0 %v16, 112
    %v18 = vpop.permute.xlu0 %17
    %vm19 = vcmask 64512
    %s20 = scalar_lea.vmem [#allocation0], 2
    %21 = vst.msk [vmem:[%s20] sm:$0x1] %vm19, %v18
    %v22 = vld [vmem:[#allocation1] sm:$0x1]
    %23 = vrot.lane.b32.xlu0 %v22, 104
    %v24 = vpop.permute.xlu0 %23
    %vm25 = vcmask 64512
    %s26 = scalar_lea.vmem [#allocation0], 3
    %27 = vst.msk [vmem:[%s26] sm:$0x1] %vm25, %v24
    %s29 = sshll.u32 1, 4
    %s30 = ssub.s32 %s29, 1
    %v32 = vld [vmem:[#allocation0] sm:%s30]
    %s33 = sshll.u32 1, 4
    %s34 = ssub.s32 %s33, 1
    %35 = vst [vmem:[%s1] sm:%s34] %v32

// kernel: tile.18
$region0: #{tile.18}
  #allocation0 [shape = 's32[1]{0}', space=sflag, size = 0x4, scoped, tag = 'scoped memory for tile.18']
  %s0 = inlined_call_operand.vmem [shape: f32[8], index: 0, kind: input, shape index: {}]
  %s1 = inlined_call_operand.vmem [shape: f32[4,8], index: 1, kind: output, shape index: {}]
  // Predicated region
  $region2: #{tile.18} parent=0 // pred_check
    _
  $region3: #{tile.18} parent=0 // pred_check_branch
    %3 = sbr.rel (0) target = $region5
  $region4: #{tile.18} parent=0 // pred_region
    _
  $region5: #{tile.18} parent=0 // pred_fallthru
    _
  %v4 = vld [vmem:[%s0] ss:$0 sm:$0xff]
  %5 = vst [vmem:[%s1] sm:$0xf] %v4

// kernel: tile.19
$region0: #{tile.19}
  %s0 = inlined_call_operand.vmem [shape: f32[4,8], index: 0, kind: input, shape index: {}]
  %s1 = inlined_call_operand.vmem [shape: f32[32], index: 1, kind: output, shape index: {}]
  $region1: #{tile.19} parent=0
    #allocation0 [shape = 'u8[4096]{0}', space=vmem, size = 0x1000, scoped, tag = 'scoped mem for output reshape']
    #allocation1 [shape = 'u8[4096]{0}', space=vmem, size = 0x1000, scoped, tag = 'scoped mem for input reshape']
    %s3 = sshll.u32 1, 4
    %s4 = ssub.s32 %s3, 1
    %v5 = vld [vmem:[%s0] sm:%s4]
    %6 = vst [vmem:[#allocation1] sm:%s4] %v5
    %v7 = vld [vmem:[#allocation1] sm:$0x1]
    %vm8 = vcmask 64512
    %9 = vst.msk [vmem:[#allocation0] sm:$0x1] %vm8, %v7
    %s10 = scalar_lea.vmem [#allocation1], 3
    %v11 = vld [vmem:[%s10] sm:$0x1]
    %12 = vrot.lane.b32.xlu0 %v11, 24
    %v13 = vpop.permute.xlu0 %12
    %vm14 = vcmask 261312
    %15 = vst.msk [vmem:[#allocation0] sm:$0x1] %vm14, %v13
    %s16 = scalar_lea.vmem [#allocation1], 2
    %v17 = vld [vmem:[%s16] sm:$0x1]
    %18 = vrot.lane.b32.xlu0 %v17, 16
    %v19 = vpop.permute.xlu0 %18
    %vm20 = vcmask 195712
    %21 = vst.msk [vmem:[#allocation0] sm:$0x1] %vm20, %v19
    %s22 = scalar_lea.vmem [#allocation1], 1
    %v23 = vld [vmem:[%s22] sm:$0x1]
    %24 = vrot.lane.b32.xlu0 %v23, 8
    %v25 = vpop.permute.xlu0 %24
    %vm26 = vcmask 130112
    %27 = vst.msk [vmem:[#allocation0] sm:$0x1] %vm26, %v25
    %s29 = sshll.u32 1, 1
    %s30 = ssub.s32 %s29, 1
    %v32 = vld [vmem:[#allocation0] sm:%s30]
    %s33 = sshll.u32 1, 1
    %s34 = ssub.s32 %s33, 1
    %35 = vst [vmem:[%s1] sm:%s34] %v32

// kernel: upconv_forward.2
$region0: #{upconv_forward.2}
  #allocation0 [shape = 'u32[]', space=smem, size = 0x4, offset = 0x4, fixed_abs, tag = 'smem constant byte address 0x4 - core index']
  #allocation1 [shape = 'u32[144,128]{1,0:T(1,128)}', space=vmem, size = 0x12000, scoped, tag = 'internal scratch']
  %s0 = inlined_call_operand.vmem [shape: bf16[512,36], index: 0, kind: input, shape index: {}]
  %s1 = inlined_call_operand.vmem [shape: bf16[36,128], index: 1, kind: input, shape index: {}]
  %s2 = inlined_call_operand.vmem [shape: f32[4,2,128], index: 2, kind: output, shape index: {}]
  %s3 = sld [smem:[#allocation0]]
  $region41: #{upconv_forward.2} parent=0
    _
  %s5 = ssub.s32 1, %s3
  %s6 = scalar_select 0, %s5, %s3
  loop: start=0, step=1, limit=6
  $region2: #{upconv_forward.2} parent=0 // loop_pre_header
    _
  $region3: #{upconv_forward.2} parent=0 // loop_header
    %s8 = sphi 0, %s12
    %p9 = scmp.ge.s32.totalorder %s8, 6
    %s18 = sphi 0, %s20
    %s21 = sphi 0, %s18
    %s22 = sphi 0, %s21
    %s38 = sphi 0, %s22
    %s42 = sphi 0, %s42
    %s44 = sphi 0, %s42
    %s45 = sphi 0, %s44
    %s59 = sphi 0, %s45
    %s65 = sphi 0, %s67
    %s68 = sphi 0, %s65
    %s69 = sphi 0, %s68
    %s85 = sphi 0, %s69
  $region4: #{upconv_forward.2} parent=0 // loop_header_branch
    %11 = sbr.rel (%p9) target = $region8
  $region5: #{upconv_forward.2} parent=0 // loop_body
    %s13 = ssub.s32 %s8, 1
    %s14 = ssub.s32 %s8, 2
    %s15 = sadd.s32 %s8, 1
    %s16 = ssub.s32 %s8, %s15
    %p17 = scmp.eq.s32.totalorder %s16, 0
    %s19 = sadd.s32 %s18, 1
    %s20 = scalar_select %p17, %s18, %s19
    %p23 = pneg %p17
    %p24 = scmp.eq.s32.totalorder %s8, 3
    %p25 = por %p23, %p24
    %p26 = scmp.ne.s32.totalorder %s18, %s21
    %p27 = scmp.eq.s32.totalorder %s8, 0
    %p28 = por %p26, %p27
    %p29 = scmp.ne.s32.totalorder %s18, %s21
    %p30 = scmp.eq.s32.totalorder %s13, 3
    %p31 = por %p29, %p30
    %p32 = scmp.ne.s32.totalorder %s21, %s22
    %p33 = scmp.eq.s32.totalorder %s13, 0
    %p34 = por %p32, %p33
    %p35 = scmp.ne.s32.totalorder %s21, %s22
    %p36 = scmp.eq.s32.totalorder %s14, 3
    %p37 = por %p35, %p36
    %p39 = scmp.ne.s32.totalorder %s22, %s38
    %p40 = scmp.eq.s32.totalorder %s14, 0
    %p41 = por %p39, %p40
    %s43 = sadd.s32 %s42, 1
    %p46 = scmp.eq.s32.totalorder %s8, 3
    %p47 = scmp.ne.s32.totalorder %s42, %s44
    %p48 = scmp.eq.s32.totalorder %s8, 0
    %p49 = por %p47, %p48
    %p50 = scmp.ne.s32.totalorder %s42, %s44
    %p51 = scmp.eq.s32.totalorder %s13, 3
    %p52 = por %p50, %p51
    %p53 = scmp.ne.s32.totalorder %s44, %s45
    %p54 = scmp.eq.s32.totalorder %s13, 0
    %p55 = por %p53, %p54
    %p56 = scmp.ne.s32.totalorder %s44, %s45
    %p57 = scmp.eq.s32.totalorder %s14, 3
    %p58 = por %p56, %p57
    %p60 = scmp.ne.s32.totalorder %s45, %s59
    %p61 = scmp.eq.s32.totalorder %s14, 0
    %p62 = por %p60, %p61
    %s63 = ssub.s32 %s8, %s15
    %p64 = scmp.eq.s32.totalorder %s63, 0
    %s66 = sadd.s32 %s65, 1
    %s67 = scalar_select %p64, %s65, %s66
    %p70 = pneg %p64
    %p71 = scmp.eq.s32.totalorder %s8, 3
    %p72 = por %p70, %p71
    %p73 = scmp.ne.s32.totalorder %s65, %s68
    %p74 = scmp.eq.s32.totalorder %s8, 0
    %p75 = por %p73, %p74
    %p76 = scmp.ne.s32.totalorder %s65, %s68
    %p77 = scmp.eq.s32.totalorder %s13, 3
    %p78 = por %p76, %p77
    %p79 = scmp.ne.s32.totalorder %s68, %s69
    %p80 = scmp.eq.s32.totalorder %s13, 0
    %p81 = por %p79, %p80
    %p82 = scmp.ne.s32.totalorder %s68, %s69
    %p83 = scmp.eq.s32.totalorder %s14, 3
    %p84 = por %p82, %p83
    %p86 = scmp.ne.s32.totalorder %s69, %s85
    %p87 = scmp.eq.s32.totalorder %s14, 0
    %p88 = por %p86, %p87
    %p89 = scmp.le.s32.totalorder 1, %s8
    %p90 = scmp.lt.s32.totalorder %s8, 5
    %p91 = pnand %p89, %p90
    %p92 = pneg %p91
    // Predicated region
    $region9: #{upconv_forward.2} parent=5 // pred_check
      _
    $region10: #{upconv_forward.2} parent=5 // pred_check_branch
      %94 = sbr.rel (%p91) target = $region12
    $region11: #{upconv_forward.2} parent=5 // pred_region
      %s95 = ssub.s32 %s8, 1
      // Predicated region
      $region13: #{upconv_forward.2} parent=11 // pred_check
        %p96 = pneg %p55
      $region14: #{upconv_forward.2} parent=11 // pred_check_branch
        %98 = sbr.rel (%p96) target = $region16
      $region15: #{upconv_forward.2} parent=11 // pred_region
        _
      $region16: #{upconv_forward.2} parent=11 // pred_fallthru
        _
    $region12: #{upconv_forward.2} parent=5 // pred_fallthru
      _
    %p99 = scmp.lt.s32.totalorder %s8, 4
    // Predicated region
    $region17: #{upconv_forward.2} parent=5 // pred_check
      %p100 = pneg %p99
    $region18: #{upconv_forward.2} parent=5 // pred_check_branch
      %102 = sbr.rel (%p100) target = $region20
    $region19: #{upconv_forward.2} parent=5 // pred_region
      // Predicated region
      $region21: #{upconv_forward.2} parent=19 // pred_check
        %p103 = pneg %p28
      $region22: #{upconv_forward.2} parent=19 // pred_check_branch
        %105 = sbr.rel (%p103) target = $region24
      $region23: #{upconv_forward.2} parent=19 // pred_region
        %s106 = smul.u32 16, %s8
        %p107 = scmp.lt.s32.totalorder %s106, 63
        %s108 = scalar_select %p107, %s106, 63
        %s109 = smul.addr %s108, 4
        %s110 = scalar_lea.vmem %s0, %s109
        %s111 = smul.u32 16, %s8
      $region24: #{upconv_forward.2} parent=19 // pred_fallthru
        _
    $region20: #{upconv_forward.2} parent=5 // pred_fallthru
      _
    %p112 = scmp.le.s32.totalorder 1, %s8
    %p113 = scmp.lt.s32.totalorder %s8, 5
    %p114 = pnand %p112, %p113
    %p115 = pneg %p114
    // Predicated region
    $region25: #{upconv_forward.2} parent=5 // pred_check
      _
    $region26: #{upconv_forward.2} parent=5 // pred_check_branch
      %117 = sbr.rel (%p114) target = $region28
    $region27: #{upconv_forward.2} parent=5 // pred_region
      %s118 = ssub.s32 %s8, 1
      %s119 = smul.u32 16, %s13
      %p120 = scmp.lt.s32.totalorder %s119, 63
      %s121 = scalar_select %p120, %s119, 63
      %s122 = smul.addr %s121, 4
      %s123 = scalar_lea.vmem %s0, %s122
      %p124 = pneg %p34
      %p125 = pneg %p31
      %p126 = pneg %p55
      %p127 = pneg %p52
      %p128 = pneg %p81
      %p129 = pneg %p78
      %p130 = scmp.lt.s32.totalorder %s13, 3
      %s131 = scalar_select %p130, %s13, 3
      %s132 = smul.addr %s131, 2
      %s133 = scalar_lea.vmem %s2, %s132
      %s134 = smul.u32 16, %s13
      %p135 = scmp.lt.s32.totalorder %s134, 63
      %s136 = scalar_select %p135, %s134, 63
      %s137 = smul.addr %s136, 4
      %s138 = scalar_lea.vmem %s0, %s137
      %s139 = smul.u32 16, %s13
      %p140 = scmp.lt.s32.totalorder %s13, 3
      %s141 = scalar_select %p140, %s13, 3
      %s142 = smul.addr %s141, 2
      %s143 = scalar_lea.vmem %s2, %s142
      %v145 = vld [vmem:[%s138] sm:$0xf]
      %v146 = vld [vmem:[%s138 + $0x4] sm:$0xf]
      %v147 = vld [vmem:[%s138 + $0x8] sm:$0xf]
      %v148 = vld [vmem:[%s138 + $0xc] sm:$0xf]
      %v149 = vld [vmem:[%s138 + $0x10] sm:$0xf]
      %v150 = vld [vmem:[%s138 + $0x14] sm:$0xf]
      %v151 = vld [vmem:[%s138 + $0x18] sm:$0xf]
      %v152 = vld [vmem:[%s138 + $0x1c] sm:$0xf]
      %v153 = vld [vmem:[%s138 + $0x20] sm:$0xf]
      %v154 = vld [vmem:[%s138 + $0x24] sm:$0xf]
      %v155 = vld [vmem:[%s138 + $0x28] sm:$0xf]
      %v156 = vld [vmem:[%s138 + $0x2c] sm:$0xf]
      %v157 = vld [vmem:[%s138 + $0x30] sm:$0xf]
      %v158 = vld [vmem:[%s138 + $0x34] sm:$0xf]
      %v159 = vld [vmem:[%s138 + $0x38] sm:$0xf]
      %v160 = vld [vmem:[%s138 + $0x3c] sm:$0xf]
      %v161 = vld [vmem:[%s1] sm:$0xf]
      %v162 = vld [vmem:[%s1 + $0x4] sm:$0xf]
      %v163 = vld [vmem:[%s1 + $0x8] sm:$0xf]
      %v164 = vld [vmem:[%s1 + $0xc] sm:$0xf]
      %v165 = vld [vmem:[%s1 + $0x10] sm:$0x3]
      %v182 = vunpack.c.l.b16 %v145
      %v183 = vunpack.c.l.b16 %v146
      %v184 = vunpack.c.l.b16 %v147
      %v185 = vunpack.c.l.b16 %v148
      %v186 = vunpack.c.l.b16 %v149
      %v187 = vunpack.c.l.b16 %v150
      %v188 = vunpack.c.l.b16 %v151
      %v189 = vunpack.c.l.b16 %v152
      %v190 = vunpack.c.l.b16 %v153
      %v191 = vunpack.c.l.b16 %v154
      %v192 = vunpack.c.l.b16 %v155
      %v193 = vunpack.c.l.b16 %v156
      %v194 = vunpack.c.l.b16 %v157
      %v195 = vunpack.c.l.b16 %v158
      %v196 = vunpack.c.l.b16 %v159
      %v197 = vunpack.c.l.b16 %v160
      %v198 = vpack.c.b16 %v183, %v182
      %v199 = vpack.c.b16 %v185, %v184
      %v200 = vpack.c.b16 %v187, %v186
      %v201 = vpack.c.b16 %v189, %v188
      %v202 = vpack.c.b16 %v191, %v190
      %v203 = vpack.c.b16 %v193, %v192
      %v204 = vpack.c.b16 %v195, %v194
      %v205 = vpack.c.b16 %v197, %v196
      %v211 = vunpack.c.l.b16 %v161
      %v212 = vunpack.c.l.b16 %v162
      %v213 = vunpack.c.l.b16 %v163
      %v214 = vunpack.c.l.b16 %v164
      %v215 = vunpack.c.l.b16 %v165
      %v216 = vpack.c.b16 %v212, %v211
      %v217 = vpack.c.b16 %v214, %v213
      %v218 = vpack.c.b16 %v215, %v215
      %vm221 = vcmask 293888
      %v223 = vsel %vm221, %v198, 0
      %v226 = vsel %vm221, %v199, 0
      %v229 = vsel %vm221, %v200, 0
      %v232 = vsel %vm221, %v201, 0
      %v235 = vsel %vm221, %v202, 0
      %v238 = vsel %vm221, %v203, 0
      %v241 = vsel %vm221, %v204, 0
      %v244 = vsel %vm221, %v205, 0
      %vm246 = vcmask 1041408
      %v248 = vsel %vm246, %v218, 0
      %250 = vmatprep.subr.bf16.mxu0 0
      %251 = vmatpush1.bf16.msra.mxu0 0
      %252 = vmatprep.subr.bf16.mxu0 0
      %253 = vmatpush1.bf16.msra.mxu0 0
      %254 = vmatprep.subr.bf16.mxu0 0
      %255 = vmatpush1.bf16.msra.mxu0 0
      %256 = vmatprep.subr.bf16.mxu0 0
      %257 = vmatpush1.bf16.msra.mxu0 0
      %258 = vmatprep.subr.bf16.mxu0 0
      %259 = vmatpush1.bf16.msra.mxu0 0
      %260 = vmatprep.subr.bf16.mxu0 0
      %261 = vmatpush1.bf16.msra.mxu0 %v248
      %262 = vmatprep.subr.bf16.mxu0 0
      %263 = vmatpush1.bf16.msra.mxu0 %v217
      %264 = vmatprep.subr.bf16.mxu0 0
      %265 = vmatpush1.bf16.msra.mxu0 %v216
      %266 = vmatprep.subr.bf16.mxu0 0
      %267 = vmatpush2.bf16.msra.mxu0 0
      %268 = vmatprep.subr.bf16.mxu0 0
      %269 = vmatpush2.bf16.msra.mxu0 0
      %270 = vmatprep.subr.bf16.mxu0 0
      %271 = vmatpush2.bf16.msra.mxu0 0
      %272 = vmatprep.subr.bf16.mxu0 0
      %273 = vmatpush2.bf16.msra.mxu0 0
      %274 = vmatprep.subr.bf16.mxu0 0
      %275 = vmatpush2.bf16.msra.mxu0 0
      %276 = vmatprep.subr.bf16.mxu0 0
      %277 = vmatpush2.bf16.msra.mxu0 0
      %278 = vmatprep.subr.bf16.mxu0 0
      %279 = vmatpush2.bf16.msra.mxu0 0
      %280 = vmatprep.subr.bf16.mxu0 0
      %281 = vmatpush2.bf16.msra.mxu0 0
      %282 = vmatprep.mubr.bf16.mxu0 0
      %283 = vmatmul.mubr.bf16.gmra.mxu0 %v223
      %v284 = vpop.f32.mrf.mxu0
      %v285 = vadd.f32 0.0, %v284
      %v286 = vpop.f32.mrf.mxu0
      %v287 = vpop.f32.mrf.mxu0
      %v288 = vadd.f32 0.0, %v287
      %v289 = vpop.f32.mrf.mxu0
      %290 = vmatprep.mubr.bf16.mxu0 0
      %291 = vmatmul.mubr.bf16.gmra.mxu0 %v226
      %v292 = vpop.f32.mrf.mxu0
      %v293 = vadd.f32 0.0, %v292
      %v294 = vpop.f32.mrf.mxu0
      %v295 = vpop.f32.mrf.mxu0
      %v296 = vadd.f32 0.0, %v295
      %v297 = vpop.f32.mrf.mxu0
      %298 = vmatprep.mubr.bf16.mxu0 0
      %299 = vmatmul.mubr.bf16.gmra.mxu0 %v229
      %v300 = vpop.f32.mrf.mxu0
      %v301 = vadd.f32 0.0, %v300
      %v302 = vpop.f32.mrf.mxu0
      %v303 = vpop.f32.mrf.mxu0
      %v304 = vadd.f32 0.0, %v303
      %v305 = vpop.f32.mrf.mxu0
      %306 = vmatprep.mubr.bf16.mxu0 0
      %307 = vmatmul.mubr.bf16.gmra.mxu0 %v232
      %v308 = vpop.f32.mrf.mxu0
      %v309 = vadd.f32 0.0, %v308
      %v310 = vpop.f32.mrf.mxu0
      %v311 = vpop.f32.mrf.mxu0
      %v312 = vadd.f32 0.0, %v311
      %v313 = vpop.f32.mrf.mxu0
      %314 = vmatprep.mubr.bf16.mxu0 0
      %315 = vmatmul.mubr.bf16.gmra.mxu0 %v235
      %v316 = vpop.f32.mrf.mxu0
      %v317 = vadd.f32 0.0, %v316
      %v318 = vpop.f32.mrf.mxu0
      %v319 = vpop.f32.mrf.mxu0
      %v320 = vadd.f32 0.0, %v319
      %v321 = vpop.f32.mrf.mxu0
      %322 = vmatprep.mubr.bf16.mxu0 0
      %323 = vmatmul.mubr.bf16.gmra.mxu0 %v238
      %v324 = vpop.f32.mrf.mxu0
      %v325 = vadd.f32 0.0, %v324
      %v326 = vpop.f32.mrf.mxu0
      %v327 = vpop.f32.mrf.mxu0
      %v328 = vadd.f32 0.0, %v327
      %v329 = vpop.f32.mrf.mxu0
      %330 = vmatprep.mubr.bf16.mxu0 0
      %331 = vmatmul.mubr.bf16.gmra.mxu0 %v241
      %v332 = vpop.f32.mrf.mxu0
      %v333 = vadd.f32 0.0, %v332
      %v334 = vpop.f32.mrf.mxu0
      %v335 = vpop.f32.mrf.mxu0
      %v336 = vadd.f32 0.0, %v335
      %v337 = vpop.f32.mrf.mxu0
      %338 = vmatprep.mubr.bf16.mxu0 0
      %339 = vmatmul.mubr.bf16.gmra.mxu0 %v244
      %v340 = vpop.f32.mrf.mxu0
      %v341 = vadd.f32 0.0, %v340
      %v342 = vpop.f32.mrf.mxu0
      %v343 = vpop.f32.mrf.mxu0
      %v344 = vadd.f32 0.0, %v343
      %v345 = vpop.f32.mrf.mxu0
      %346 = vdwg.mxu0
      %v347 = vadd.f32 %v285, %v288
      %v348 = vadd.f32 %v347, %v293
      %v349 = vadd.f32 %v348, %v296
      %v350 = vadd.f32 %v349, %v301
      %v351 = vadd.f32 %v350, %v304
      %v352 = vadd.f32 %v351, %v309
      %v353 = vadd.f32 %v352, %v312
      %v354 = vadd.f32 %v353, %v317
      %v355 = vadd.f32 %v354, %v320
      %v356 = vadd.f32 %v355, %v325
      %v357 = vadd.f32 %v356, %v328
      %v358 = vadd.f32 %v357, %v333
      %v359 = vadd.f32 %v358, %v336
      %v360 = vadd.f32 %v359, %v341
      %v361 = vadd.f32 %v360, %v344
      %v362 = vrot.slane %v361, 4
      %v363 = vadd.f32 %v361, %v362
      %v364 = vrot.slane %v363, 2
      %v365 = vadd.f32 %v363, %v364
      %v366 = vrot.slane %v365, 1
      %v367 = vadd.f32 %v365, %v366
      %v368 = vmul.f32 %v285, %v285
      %v369 = vmul.f32 %v288, %v288
      %v370 = vmul.f32 %v293, %v293
      %v371 = vmul.f32 %v296, %v296
      %v372 = vmul.f32 %v301, %v301
      %v373 = vmul.f32 %v304, %v304
      %v374 = vmul.f32 %v309, %v309
      %v375 = vmul.f32 %v312, %v312
      %v376 = vmul.f32 %v317, %v317
      %v377 = vmul.f32 %v320, %v320
      %v378 = vmul.f32 %v325, %v325
      %v379 = vmul.f32 %v328, %v328
      %v380 = vmul.f32 %v333, %v333
      %v381 = vmul.f32 %v336, %v336
      %v382 = vmul.f32 %v341, %v341
      %v383 = vmul.f32 %v344, %v344
      %v384 = vadd.f32 %v368, %v369
      %v385 = vadd.f32 %v384, %v370
      %v386 = vadd.f32 %v385, %v371
      %v387 = vadd.f32 %v386, %v372
      %v388 = vadd.f32 %v387, %v373
      %v389 = vadd.f32 %v388, %v374
      %v390 = vadd.f32 %v389, %v375
      %v391 = vadd.f32 %v390, %v376
      %v392 = vadd.f32 %v391, %v377
      %v393 = vadd.f32 %v392, %v378
      %v394 = vadd.f32 %v393, %v379
      %v395 = vadd.f32 %v394, %v380
      %v396 = vadd.f32 %v395, %v381
      %v397 = vadd.f32 %v396, %v382
      %v398 = vadd.f32 %v397, %v383
      %v399 = vrot.slane %v398, 4
      %v400 = vadd.f32 %v398, %v399
      %v401 = vrot.slane %v400, 2
      %v402 = vadd.f32 %v400, %v401
      %v403 = vrot.slane %v402, 1
      %v404 = vadd.f32 %v402, %v403
      %vm405 = vcmask 1040384
      %v406 = vsel %vm405, %v367, %v404
      %407 = vst [vmem:[%s143] sm:$0x3] %v406
      %p408 = scmp.lt.s32.totalorder %s13, 3
      %s409 = scalar_select %p408, %s13, 3
      %s410 = smul.addr %s409, 2
      %s411 = scalar_lea.vmem %s2, %s410
      // Predicated region
      $region29: #{upconv_forward.2} parent=27 // pred_check
        %p412 = pneg %p78
      $region30: #{upconv_forward.2} parent=27 // pred_check_branch
        %414 = sbr.rel (%p412) target = $region32
      $region31: #{upconv_forward.2} parent=27 // pred_region
        _
      $region32: #{upconv_forward.2} parent=27 // pred_fallthru
        _
    $region28: #{upconv_forward.2} parent=5 // pred_fallthru
      _
    %p415 = scmp.le.s32.totalorder 2, %s8
    // Predicated region
    $region33: #{upconv_forward.2} parent=5 // pred_check
      %p416 = pneg %p415
    $region34: #{upconv_forward.2} parent=5 // pred_check_branch
      %418 = sbr.rel (%p416) target = $region36
    $region35: #{upconv_forward.2} parent=5 // pred_region
      %s419 = ssub.s32 %s8, 2
      // Predicated region
      $region37: #{upconv_forward.2} parent=35 // pred_check
        %p420 = pneg %p84
      $region38: #{upconv_forward.2} parent=35 // pred_check_branch
        %422 = sbr.rel (%p420) target = $region40
      $region39: #{upconv_forward.2} parent=35 // pred_region
        %p423 = scmp.lt.s32.totalorder %s14, 3
        %s424 = scalar_select %p423, %s14, 3
        %s425 = smul.addr %s424, 2
        %s426 = scalar_lea.vmem %s2, %s425
      $region40: #{upconv_forward.2} parent=35 // pred_fallthru
        _
    $region36: #{upconv_forward.2} parent=5 // pred_fallthru
      _
  $region6: #{upconv_forward.2} parent=0 // loop_footer
    %s12 = sadd.s32 1, %s8
  $region7: #{upconv_forward.2} parent=0 // loop_footer_branch
    %7 = sbr.rel target = $region3
  $region8: #{upconv_forward.2} parent=0 // loop_exit
    _

// kernel: upconv_forward.3
$region0: #{upconv_forward.3}
  #allocation0 [shape = 'u32[]', space=smem, size = 0x4, offset = 0x4, fixed_abs, tag = 'smem constant byte address 0x4 - core index']
  #allocation1 [shape = 'u32[144,128]{1,0:T(1,128)}', space=vmem, size = 0x12000, scoped, tag = 'internal scratch']
  %s0 = inlined_call_operand.vmem [shape: bf16[512,36], index: 0, kind: input, shape index: {}]
  %s1 = inlined_call_operand.vmem [shape: bf16[36,128], index: 1, kind: input, shape index: {}]
  %s2 = inlined_call_operand.vmem [shape: f32[1,128], index: 2, kind: input, shape index: {}]
  %s3 = inlined_call_operand.vmem [shape: f32[1,128], index: 3, kind: input, shape index: {}]
  %s4 = inlined_call_operand.vmem [shape: f32[512,128], index: 4, kind: output, shape index: {}]
  %s5 = sld [smem:[#allocation0]]
  $region49: #{upconv_forward.3} parent=0
    _
  %s7 = ssub.s32 1, %s5
  %s8 = scalar_select 0, %s7, %s5
  loop: start=0, step=1, limit=6
  $region2: #{upconv_forward.3} parent=0 // loop_pre_header
    _
  $region3: #{upconv_forward.3} parent=0 // loop_header
    %s10 = sphi 0, %s14
    %p11 = scmp.ge.s32.totalorder %s10, 6
    %s20 = sphi 0, %s22
    %s23 = sphi 0, %s20
    %s24 = sphi 0, %s23
    %s40 = sphi 0, %s24
    %s44 = sphi 0, %s44
    %s46 = sphi 0, %s44
    %s47 = sphi 0, %s46
    %s61 = sphi 0, %s47
    %s65 = sphi 0, %s65
    %s67 = sphi 0, %s65
    %s68 = sphi 0, %s67
    %s82 = sphi 0, %s68
    %s86 = sphi 0, %s86
    %s88 = sphi 0, %s86
    %s89 = sphi 0, %s88
    %s103 = sphi 0, %s89
    %s109 = sphi 0, %s111
    %s112 = sphi 0, %s109
    %s113 = sphi 0, %s112
    %s129 = sphi 0, %s113
  $region4: #{upconv_forward.3} parent=0 // loop_header_branch
    %13 = sbr.rel (%p11) target = $region8
  $region5: #{upconv_forward.3} parent=0 // loop_body
    %s15 = ssub.s32 %s10, 1
    %s16 = ssub.s32 %s10, 2
    %s17 = sadd.s32 %s10, 1
    %s18 = ssub.s32 %s10, %s17
    %p19 = scmp.eq.s32.totalorder %s18, 0
    %s21 = sadd.s32 %s20, 1
    %s22 = scalar_select %p19, %s20, %s21
    %p25 = pneg %p19
    %p26 = scmp.eq.s32.totalorder %s10, 3
    %p27 = por %p25, %p26
    %p28 = scmp.ne.s32.totalorder %s20, %s23
    %p29 = scmp.eq.s32.totalorder %s10, 0
    %p30 = por %p28, %p29
    %p31 = scmp.ne.s32.totalorder %s20, %s23
    %p32 = scmp.eq.s32.totalorder %s15, 3
    %p33 = por %p31, %p32
    %p34 = scmp.ne.s32.totalorder %s23, %s24
    %p35 = scmp.eq.s32.totalorder %s15, 0
    %p36 = por %p34, %p35
    %p37 = scmp.ne.s32.totalorder %s23, %s24
    %p38 = scmp.eq.s32.totalorder %s16, 3
    %p39 = por %p37, %p38
    %p41 = scmp.ne.s32.totalorder %s24, %s40
    %p42 = scmp.eq.s32.totalorder %s16, 0
    %p43 = por %p41, %p42
    %s45 = sadd.s32 %s44, 1
    %p48 = scmp.eq.s32.totalorder %s10, 3
    %p49 = scmp.ne.s32.totalorder %s44, %s46
    %p50 = scmp.eq.s32.totalorder %s10, 0
    %p51 = por %p49, %p50
    %p52 = scmp.ne.s32.totalorder %s44, %s46
    %p53 = scmp.eq.s32.totalorder %s15, 3
    %p54 = por %p52, %p53
    %p55 = scmp.ne.s32.totalorder %s46, %s47
    %p56 = scmp.eq.s32.totalorder %s15, 0
    %p57 = por %p55, %p56
    %p58 = scmp.ne.s32.totalorder %s46, %s47
    %p59 = scmp.eq.s32.totalorder %s16, 3
    %p60 = por %p58, %p59
    %p62 = scmp.ne.s32.totalorder %s47, %s61
    %p63 = scmp.eq.s32.totalorder %s16, 0
    %p64 = por %p62, %p63
    %s66 = sadd.s32 %s65, 1
    %p69 = scmp.eq.s32.totalorder %s10, 3
    %p70 = scmp.ne.s32.totalorder %s65, %s67
    %p71 = scmp.eq.s32.totalorder %s10, 0
    %p72 = por %p70, %p71
    %p73 = scmp.ne.s32.totalorder %s65, %s67
    %p74 = scmp.eq.s32.totalorder %s15, 3
    %p75 = por %p73, %p74
    %p76 = scmp.ne.s32.totalorder %s67, %s68
    %p77 = scmp.eq.s32.totalorder %s15, 0
    %p78 = por %p76, %p77
    %p79 = scmp.ne.s32.totalorder %s67, %s68
    %p80 = scmp.eq.s32.totalorder %s16, 3
    %p81 = por %p79, %p80
    %p83 = scmp.ne.s32.totalorder %s68, %s82
    %p84 = scmp.eq.s32.totalorder %s16, 0
    %p85 = por %p83, %p84
    %s87 = sadd.s32 %s86, 1
    %p90 = scmp.eq.s32.totalorder %s10, 3
    %p91 = scmp.ne.s32.totalorder %s86, %s88
    %p92 = scmp.eq.s32.totalorder %s10, 0
    %p93 = por %p91, %p92
    %p94 = scmp.ne.s32.totalorder %s86, %s88
    %p95 = scmp.eq.s32.totalorder %s15, 3
    %p96 = por %p94, %p95
    %p97 = scmp.ne.s32.totalorder %s88, %s89
    %p98 = scmp.eq.s32.totalorder %s15, 0
    %p99 = por %p97, %p98
    %p100 = scmp.ne.s32.totalorder %s88, %s89
    %p101 = scmp.eq.s32.totalorder %s16, 3
    %p102 = por %p100, %p101
    %p104 = scmp.ne.s32.totalorder %s89, %s103
    %p105 = scmp.eq.s32.totalorder %s16, 0
    %p106 = por %p104, %p105
    %s107 = ssub.s32 %s10, %s17
    %p108 = scmp.eq.s32.totalorder %s107, 0
    %s110 = sadd.s32 %s109, 1
    %s111 = scalar_select %p108, %s109, %s110
    %p114 = pneg %p108
    %p115 = scmp.eq.s32.totalorder %s10, 3
    %p116 = por %p114, %p115
    %p117 = scmp.ne.s32.totalorder %s109, %s112
    %p118 = scmp.eq.s32.totalorder %s10, 0
    %p119 = por %p117, %p118
    %p120 = scmp.ne.s32.totalorder %s109, %s112
    %p121 = scmp.eq.s32.totalorder %s15, 3
    %p122 = por %p120, %p121
    %p123 = scmp.ne.s32.totalorder %s112, %s113
    %p124 = scmp.eq.s32.totalorder %s15, 0
    %p125 = por %p123, %p124
    %p126 = scmp.ne.s32.totalorder %s112, %s113
    %p127 = scmp.eq.s32.totalorder %s16, 3
    %p128 = por %p126, %p127
    %p130 = scmp.ne.s32.totalorder %s113, %s129
    %p131 = scmp.eq.s32.totalorder %s16, 0
    %p132 = por %p130, %p131
    %p133 = scmp.le.s32.totalorder 1, %s10
    %p134 = scmp.lt.s32.totalorder %s10, 5
    %p135 = pnand %p133, %p134
    %p136 = pneg %p135
    // Predicated region
    $region9: #{upconv_forward.3} parent=5 // pred_check
      _
    $region10: #{upconv_forward.3} parent=5 // pred_check_branch
      %138 = sbr.rel (%p135) target = $region12
    $region11: #{upconv_forward.3} parent=5 // pred_region
      %s139 = ssub.s32 %s10, 1
      // Predicated region
      $region13: #{upconv_forward.3} parent=11 // pred_check
        %p140 = pneg %p57
      $region14: #{upconv_forward.3} parent=11 // pred_check_branch
        %142 = sbr.rel (%p140) target = $region16
      $region15: #{upconv_forward.3} parent=11 // pred_region
        _
      $region16: #{upconv_forward.3} parent=11 // pred_fallthru
        _
      // Predicated region
      $region17: #{upconv_forward.3} parent=11 // pred_check
        %p143 = pneg %p78
      $region18: #{upconv_forward.3} parent=11 // pred_check_branch
        %145 = sbr.rel (%p143) target = $region20
      $region19: #{upconv_forward.3} parent=11 // pred_region
        _
      $region20: #{upconv_forward.3} parent=11 // pred_fallthru
        _
      // Predicated region
      $region21: #{upconv_forward.3} parent=11 // pred_check
        %p146 = pneg %p99
      $region22: #{upconv_forward.3} parent=11 // pred_check_branch
        %148 = sbr.rel (%p146) target = $region24
      $region23: #{upconv_forward.3} parent=11 // pred_region
        _
      $region24: #{upconv_forward.3} parent=11 // pred_fallthru
        _
    $region12: #{upconv_forward.3} parent=5 // pred_fallthru
      _
    %p149 = scmp.lt.s32.totalorder %s10, 4
    // Predicated region
    $region25: #{upconv_forward.3} parent=5 // pred_check
      %p150 = pneg %p149
    $region26: #{upconv_forward.3} parent=5 // pred_check_branch
      %152 = sbr.rel (%p150) target = $region28
    $region27: #{upconv_forward.3} parent=5 // pred_region
      // Predicated region
      $region29: #{upconv_forward.3} parent=27 // pred_check
        %p153 = pneg %p30
      $region30: #{upconv_forward.3} parent=27 // pred_check_branch
        %155 = sbr.rel (%p153) target = $region32
      $region31: #{upconv_forward.3} parent=27 // pred_region
        %s156 = smul.u32 16, %s10
        %p157 = scmp.lt.s32.totalorder %s156, 63
        %s158 = scalar_select %p157, %s156, 63
        %s159 = smul.addr %s158, 4
        %s160 = scalar_lea.vmem %s0, %s159
        %s161 = smul.u32 16, %s10
      $region32: #{upconv_forward.3} parent=27 // pred_fallthru
        _
    $region28: #{upconv_forward.3} parent=5 // pred_fallthru
      _
    %p162 = scmp.le.s32.totalorder 1, %s10
    %p163 = scmp.lt.s32.totalorder %s10, 5
    %p164 = pnand %p162, %p163
    %p165 = pneg %p164
    // Predicated region
    $region33: #{upconv_forward.3} parent=5 // pred_check
      _
    $region34: #{upconv_forward.3} parent=5 // pred_check_branch
      %167 = sbr.rel (%p164) target = $region36
    $region35: #{upconv_forward.3} parent=5 // pred_region
      %s168 = ssub.s32 %s10, 1
      %s169 = smul.u32 16, %s15
      %p170 = scmp.lt.s32.totalorder %s169, 63
      %s171 = scalar_select %p170, %s169, 63
      %s172 = smul.addr %s171, 4
      %s173 = scalar_lea.vmem %s0, %s172
      %p174 = pneg %p36
      %p175 = pneg %p33
      %p176 = pneg %p57
      %p177 = pneg %p54
      %p178 = pneg %p78
      %p179 = pneg %p75
      %p180 = pneg %p99
      %p181 = pneg %p96
      %p182 = pneg %p125
      %p183 = pneg %p122
      %s184 = smul.u32 16, %s15
      %p185 = scmp.lt.s32.totalorder %s184, 63
      %s186 = scalar_select %p185, %s184, 63
      %s187 = smul.addr %s186, 8
      %s188 = scalar_lea.vmem %s4, %s187
      %s189 = smul.u32 16, %s15
      %p190 = scmp.lt.s32.totalorder %s189, 63
      %s191 = scalar_select %p190, %s189, 63
      %s192 = smul.addr %s191, 4
      %s193 = scalar_lea.vmem %s0, %s192
      %s194 = smul.u32 16, %s15
      %s195 = smul.u32 16, %s15
      %p196 = scmp.lt.s32.totalorder %s195, 63
      %s197 = scalar_select %p196, %s195, 63
      %s198 = smul.addr %s197, 8
      %s199 = scalar_lea.vmem %s4, %s198
      %s200 = smul.u32 16, %s15
      %v202 = vld [vmem:[%s193] sm:$0xf]
      %v203 = vld [vmem:[%s193 + $0x4] sm:$0xf]
      %v204 = vld [vmem:[%s193 + $0x8] sm:$0xf]
      %v205 = vld [vmem:[%s193 + $0xc] sm:$0xf]
      %v206 = vld [vmem:[%s193 + $0x10] sm:$0xf]
      %v207 = vld [vmem:[%s193 + $0x14] sm:$0xf]
      %v208 = vld [vmem:[%s193 + $0x18] sm:$0xf]
      %v209 = vld [vmem:[%s193 + $0x1c] sm:$0xf]
      %v210 = vld [vmem:[%s193 + $0x20] sm:$0xf]
      %v211 = vld [vmem:[%s193 + $0x24] sm:$0xf]
      %v212 = vld [vmem:[%s193 + $0x28] sm:$0xf]
      %v213 = vld [vmem:[%s193 + $0x2c] sm:$0xf]
      %v214 = vld [vmem:[%s193 + $0x30] sm:$0xf]
      %v215 = vld [vmem:[%s193 + $0x34] sm:$0xf]
      %v216 = vld [vmem:[%s193 + $0x38] sm:$0xf]
      %v217 = vld [vmem:[%s193 + $0x3c] sm:$0xf]
      %v218 = vld [vmem:[%s1] sm:$0xf]
      %v219 = vld [vmem:[%s1 + $0x4] sm:$0xf]
      %v220 = vld [vmem:[%s1 + $0x8] sm:$0xf]
      %v221 = vld [vmem:[%s1 + $0xc] sm:$0xf]
      %v222 = vld [vmem:[%s1 + $0x10] sm:$0x3]
      %v239 = vunpack.c.l.b16 %v202
      %v240 = vunpack.c.l.b16 %v203
      %v241 = vunpack.c.l.b16 %v204
      %v242 = vunpack.c.l.b16 %v205
      %v243 = vunpack.c.l.b16 %v206
      %v244 = vunpack.c.l.b16 %v207
      %v245 = vunpack.c.l.b16 %v208
      %v246 = vunpack.c.l.b16 %v209
      %v247 = vunpack.c.l.b16 %v210
      %v248 = vunpack.c.l.b16 %v211
      %v249 = vunpack.c.l.b16 %v212
      %v250 = vunpack.c.l.b16 %v213
      %v251 = vunpack.c.l.b16 %v214
      %v252 = vunpack.c.l.b16 %v215
      %v253 = vunpack.c.l.b16 %v216
      %v254 = vunpack.c.l.b16 %v217
      %v255 = vpack.c.b16 %v240, %v239
      %v256 = vpack.c.b16 %v242, %v241
      %v257 = vpack.c.b16 %v244, %v243
      %v258 = vpack.c.b16 %v246, %v245
      %v259 = vpack.c.b16 %v248, %v247
      %v260 = vpack.c.b16 %v250, %v249
      %v261 = vpack.c.b16 %v252, %v251
      %v262 = vpack.c.b16 %v254, %v253
      %v268 = vunpack.c.l.b16 %v218
      %v269 = vunpack.c.l.b16 %v219
      %v270 = vunpack.c.l.b16 %v220
      %v271 = vunpack.c.l.b16 %v221
      %v272 = vunpack.c.l.b16 %v222
      %v273 = vpack.c.b16 %v269, %v268
      %v274 = vpack.c.b16 %v271, %v270
      %v275 = vpack.c.b16 %v272, %v272
      %vm278 = vcmask 293888
      %v280 = vsel %vm278, %v255, 0
      %v283 = vsel %vm278, %v256, 0
      %v286 = vsel %vm278, %v257, 0
      %v289 = vsel %vm278, %v258, 0
      %v292 = vsel %vm278, %v259, 0
      %v295 = vsel %vm278, %v260, 0
      %v298 = vsel %vm278, %v261, 0
      %v301 = vsel %vm278, %v262, 0
      %vm303 = vcmask 1041408
      %v305 = vsel %vm303, %v275, 0
      %307 = vmatprep.subr.bf16.mxu0 0
      %308 = vmatpush1.bf16.msra.mxu0 0
      %309 = vmatprep.subr.bf16.mxu0 0
      %310 = vmatpush1.bf16.msra.mxu0 0
      %311 = vmatprep.subr.bf16.mxu0 0
      %312 = vmatpush1.bf16.msra.mxu0 0
      %313 = vmatprep.subr.bf16.mxu0 0
      %314 = vmatpush1.bf16.msra.mxu0 0
      %315 = vmatprep.subr.bf16.mxu0 0
      %316 = vmatpush1.bf16.msra.mxu0 0
      %317 = vmatprep.subr.bf16.mxu0 0
      %318 = vmatpush1.bf16.msra.mxu0 %v305
      %319 = vmatprep.subr.bf16.mxu0 0
      %320 = vmatpush1.bf16.msra.mxu0 %v274
      %321 = vmatprep.subr.bf16.mxu0 0
      %322 = vmatpush1.bf16.msra.mxu0 %v273
      %323 = vmatprep.subr.bf16.mxu0 0
      %324 = vmatpush2.bf16.msra.mxu0 0
      %325 = vmatprep.subr.bf16.mxu0 0
      %326 = vmatpush2.bf16.msra.mxu0 0
      %327 = vmatprep.subr.bf16.mxu0 0
      %328 = vmatpush2.bf16.msra.mxu0 0
      %329 = vmatprep.subr.bf16.mxu0 0
      %330 = vmatpush2.bf16.msra.mxu0 0
      %331 = vmatprep.subr.bf16.mxu0 0
      %332 = vmatpush2.bf16.msra.mxu0 0
      %333 = vmatprep.subr.bf16.mxu0 0
      %334 = vmatpush2.bf16.msra.mxu0 0
      %335 = vmatprep.subr.bf16.mxu0 0
      %336 = vmatpush2.bf16.msra.mxu0 0
      %337 = vmatprep.subr.bf16.mxu0 0
      %338 = vmatpush2.bf16.msra.mxu0 0
      %339 = vmatprep.mubr.bf16.mxu0 0
      %340 = vmatmul.mubr.bf16.gmra.mxu0 %v280
      %v341 = vpop.f32.mrf.mxu0
      %v342 = vadd.f32 0.0, %v341
      %v343 = vpop.f32.mrf.mxu0
      %v344 = vpop.f32.mrf.mxu0
      %v345 = vadd.f32 0.0, %v344
      %v346 = vpop.f32.mrf.mxu0
      %347 = vmatprep.mubr.bf16.mxu0 0
      %348 = vmatmul.mubr.bf16.gmra.mxu0 %v283
      %v349 = vpop.f32.mrf.mxu0
      %v350 = vadd.f32 0.0, %v349
      %v351 = vpop.f32.mrf.mxu0
      %v352 = vpop.f32.mrf.mxu0
      %v353 = vadd.f32 0.0, %v352
      %v354 = vpop.f32.mrf.mxu0
      %355 = vmatprep.mubr.bf16.mxu0 0
      %356 = vmatmul.mubr.bf16.gmra.mxu0 %v286
      %v357 = vpop.f32.mrf.mxu0
      %v358 = vadd.f32 0.0, %v357
      %v359 = vpop.f32.mrf.mxu0
      %v360 = vpop.f32.mrf.mxu0
      %v361 = vadd.f32 0.0, %v360
      %v362 = vpop.f32.mrf.mxu0
      %363 = vmatprep.mubr.bf16.mxu0 0
      %364 = vmatmul.mubr.bf16.gmra.mxu0 %v289
      %v365 = vpop.f32.mrf.mxu0
      %v366 = vadd.f32 0.0, %v365
      %v367 = vpop.f32.mrf.mxu0
      %v368 = vpop.f32.mrf.mxu0
      %v369 = vadd.f32 0.0, %v368
      %v370 = vpop.f32.mrf.mxu0
      %371 = vmatprep.mubr.bf16.mxu0 0
      %372 = vmatmul.mubr.bf16.gmra.mxu0 %v292
      %v373 = vpop.f32.mrf.mxu0
      %v374 = vadd.f32 0.0, %v373
      %v375 = vpop.f32.mrf.mxu0
      %v376 = vpop.f32.mrf.mxu0
      %v377 = vadd.f32 0.0, %v376
      %v378 = vpop.f32.mrf.mxu0
      %379 = vmatprep.mubr.bf16.mxu0 0
      %380 = vmatmul.mubr.bf16.gmra.mxu0 %v295
      %v381 = vpop.f32.mrf.mxu0
      %v382 = vadd.f32 0.0, %v381
      %v383 = vpop.f32.mrf.mxu0
      %v384 = vpop.f32.mrf.mxu0
      %v385 = vadd.f32 0.0, %v384
      %v386 = vpop.f32.mrf.mxu0
      %387 = vmatprep.mubr.bf16.mxu0 0
      %388 = vmatmul.mubr.bf16.gmra.mxu0 %v298
      %v389 = vpop.f32.mrf.mxu0
      %v390 = vadd.f32 0.0, %v389
      %v391 = vpop.f32.mrf.mxu0
      %v392 = vpop.f32.mrf.mxu0
      %v393 = vadd.f32 0.0, %v392
      %v394 = vpop.f32.mrf.mxu0
      %395 = vmatprep.mubr.bf16.mxu0 0
      %396 = vmatmul.mubr.bf16.gmra.mxu0 %v301
      %v397 = vpop.f32.mrf.mxu0
      %v398 = vadd.f32 0.0, %v397
      %v399 = vpop.f32.mrf.mxu0
      %v400 = vpop.f32.mrf.mxu0
      %v401 = vadd.f32 0.0, %v400
      %v402 = vpop.f32.mrf.mxu0
      %403 = vdwg.mxu0
      %v404 = vld [vmem:[%s2] sm:$0x1]
      %v406 = vlaneseq
      %v407 = vshrl.u32 %v406, 7
      %v408 = vsub.s32 0, %v407
      %v409 = vrot.slane %v404, %v408
      %v411 = vmul.f32 %v342, %v409
      %v412 = vmul.f32 %v345, %v409
      %v413 = vmul.f32 %v350, %v409
      %v414 = vmul.f32 %v353, %v409
      %v415 = vmul.f32 %v358, %v409
      %v416 = vmul.f32 %v361, %v409
      %v417 = vmul.f32 %v366, %v409
      %v418 = vmul.f32 %v369, %v409
      %v419 = vmul.f32 %v374, %v409
      %v420 = vmul.f32 %v377, %v409
      %v421 = vmul.f32 %v382, %v409
      %v422 = vmul.f32 %v385, %v409
      %v423 = vmul.f32 %v390, %v409
      %v424 = vmul.f32 %v393, %v409
      %v425 = vmul.f32 %v398, %v409
      %v426 = vmul.f32 %v401, %v409
      %v427 = vld [vmem:[%s3] sm:$0x1]
      %v429 = vlaneseq
      %v430 = vshrl.u32 %v429, 7
      %v431 = vsub.s32 0, %v430
      %v432 = vrot.slane %v427, %v431
      %v434 = vadd.f32 %v411, %v432
      %v435 = vadd.f32 %v412, %v432
      %v436 = vadd.f32 %v413, %v432
      %v437 = vadd.f32 %v414, %v432
      %v438 = vadd.f32 %v415, %v432
      %v439 = vadd.f32 %v416, %v432
      %v440 = vadd.f32 %v417, %v432
      %v441 = vadd.f32 %v418, %v432
      %v442 = vadd.f32 %v419, %v432
      %v443 = vadd.f32 %v420, %v432
      %v444 = vadd.f32 %v421, %v432
      %v445 = vadd.f32 %v422, %v432
      %v446 = vadd.f32 %v423, %v432
      %v447 = vadd.f32 %v424, %v432
      %v448 = vadd.f32 %v425, %v432
      %v449 = vadd.f32 %v426, %v432
      %v450 = vmul.f32 %v434, 0.5
      %v451 = vmul.f32 %v435, 0.5
      %v452 = vmul.f32 %v436, 0.5
      %v453 = vmul.f32 %v437, 0.5
      %v454 = vmul.f32 %v438, 0.5
      %v455 = vmul.f32 %v439, 0.5
      %v456 = vmul.f32 %v440, 0.5
      %v457 = vmul.f32 %v441, 0.5
      %v458 = vmul.f32 %v442, 0.5
      %v459 = vmul.f32 %v443, 0.5
      %v460 = vmul.f32 %v444, 0.5
      %v461 = vmul.f32 %v445, 0.5
      %v462 = vmul.f32 %v446, 0.5
      %v463 = vmul.f32 %v447, 0.5
      %v464 = vmul.f32 %v448, 0.5
      %v465 = vmul.f32 %v449, 0.5
      %v466 = vmul.f32 %v434, 0.70710677
      %v467 = vmul.f32 %v435, 0.70710677
      %v468 = vmul.f32 %v436, 0.70710677
      %v469 = vmul.f32 %v437, 0.70710677
      %v470 = vmul.f32 %v438, 0.70710677
      %v471 = vmul.f32 %v439, 0.70710677
      %v472 = vmul.f32 %v440, 0.70710677
      %v473 = vmul.f32 %v441, 0.70710677
      %v474 = vmul.f32 %v442, 0.70710677
      %v475 = vmul.f32 %v443, 0.70710677
      %v476 = vmul.f32 %v444, 0.70710677
      %v477 = vmul.f32 %v445, 0.70710677
      %v478 = vmul.f32 %v446, 0.70710677
      %v479 = vmul.f32 %v447, 0.70710677
      %v480 = vmul.f32 %v448, 0.70710677
      %v481 = vmul.f32 %v449, 0.70710677
      %v482 = verf.f32.pop %v466
      %v483 = verf.f32.pop %v467
      %v484 = verf.f32.pop %v468
      %v485 = verf.f32.pop %v469
      %v486 = verf.f32.pop %v470
      %v487 = verf.f32.pop %v471
      %v488 = verf.f32.pop %v472
      %v489 = verf.f32.pop %v473
      %v490 = verf.f32.pop %v474
      %v491 = verf.f32.pop %v475
      %v492 = verf.f32.pop %v476
      %v493 = verf.f32.pop %v477
      %v494 = verf.f32.pop %v478
      %v495 = verf.f32.pop %v479
      %v496 = verf.f32.pop %v480
      %v497 = verf.f32.pop %v481
      %v498 = vadd.f32 %v482, 1.0
      %v499 = vadd.f32 %v483, 1.0
      %v500 = vadd.f32 %v484, 1.0
      %v501 = vadd.f32 %v485, 1.0
      %v502 = vadd.f32 %v486, 1.0
      %v503 = vadd.f32 %v487, 1.0
      %v504 = vadd.f32 %v488, 1.0
      %v505 = vadd.f32 %v489, 1.0
      %v506 = vadd.f32 %v490, 1.0
      %v507 = vadd.f32 %v491, 1.0
      %v508 = vadd.f32 %v492, 1.0
      %v509 = vadd.f32 %v493, 1.0
      %v510 = vadd.f32 %v494, 1.0
      %v511 = vadd.f32 %v495, 1.0
      %v512 = vadd.f32 %v496, 1.0
      %v513 = vadd.f32 %v497, 1.0
      %v514 = vmul.f32 %v450, %v498
      %v515 = vmul.f32 %v451, %v499
      %v516 = vmul.f32 %v452, %v500
      %v517 = vmul.f32 %v453, %v501
      %v518 = vmul.f32 %v454, %v502
      %v519 = vmul.f32 %v455, %v503
      %v520 = vmul.f32 %v456, %v504
      %v521 = vmul.f32 %v457, %v505
      %v522 = vmul.f32 %v458, %v506
      %v523 = vmul.f32 %v459, %v507
      %v524 = vmul.f32 %v460, %v508
      %v525 = vmul.f32 %v461, %v509
      %v526 = vmul.f32 %v462, %v510
      %v527 = vmul.f32 %v463, %v511
      %v528 = vmul.f32 %v464, %v512
      %v529 = vmul.f32 %v465, %v513
      %530 = vst [vmem:[%s199] sm:$0xff] %v514
      %531 = vst [vmem:[%s199 + $0x8] sm:$0xff] %v515
      %532 = vst [vmem:[%s199 + $0x10] sm:$0xff] %v516
      %533 = vst [vmem:[%s199 + $0x18] sm:$0xff] %v517
      %534 = vst [vmem:[%s199 + $0x20] sm:$0xff] %v518
      %535 = vst [vmem:[%s199 + $0x28] sm:$0xff] %v519
      %536 = vst [vmem:[%s199 + $0x30] sm:$0xff] %v520
      %537 = vst [vmem:[%s199 + $0x38] sm:$0xff] %v521
      %538 = vst [vmem:[%s199 + $0x40] sm:$0xff] %v522
      %539 = vst [vmem:[%s199 + $0x48] sm:$0xff] %v523
      %540 = vst [vmem:[%s199 + $0x50] sm:$0xff] %v524
      %541 = vst [vmem:[%s199 + $0x58] sm:$0xff] %v525
      %542 = vst [vmem:[%s199 + $0x60] sm:$0xff] %v526
      %543 = vst [vmem:[%s199 + $0x68] sm:$0xff] %v527
      %544 = vst [vmem:[%s199 + $0x70] sm:$0xff] %v528
      %545 = vst [vmem:[%s199 + $0x78] sm:$0xff] %v529
      %s546 = smul.u32 16, %s15
      %p547 = scmp.lt.s32.totalorder %s546, 63
      %s548 = scalar_select %p547, %s546, 63
      %s549 = smul.addr %s548, 8
      %s550 = scalar_lea.vmem %s4, %s549
      // Predicated region
      $region37: #{upconv_forward.3} parent=35 // pred_check
        %p551 = pneg %p122
      $region38: #{upconv_forward.3} parent=35 // pred_check_branch
        %553 = sbr.rel (%p551) target = $region40
      $region39: #{upconv_forward.3} parent=35 // pred_region
        %s554 = smul.u32 16, %s15
      $region40: #{upconv_forward.3} parent=35 // pred_fallthru
        _
    $region36: #{upconv_forward.3} parent=5 // pred_fallthru
      _
    %p555 = scmp.le.s32.totalorder 2, %s10
    // Predicated region
    $region41: #{upconv_forward.3} parent=5 // pred_check
      %p556 = pneg %p555
    $region42: #{upconv_forward.3} parent=5 // pred_check_branch
      %558 = sbr.rel (%p556) target = $region44
    $region43: #{upconv_forward.3} parent=5 // pred_region
      %s559 = ssub.s32 %s10, 2
      // Predicated region
      $region45: #{upconv_forward.3} parent=43 // pred_check
        %p560 = pneg %p128
      $region46: #{upconv_forward.3} parent=43 // pred_check_branch
        %562 = sbr.rel (%p560) target = $region48
      $region47: #{upconv_forward.3} parent=43 // pred_region
        %s563 = smul.u32 16, %s16
        %p564 = scmp.lt.s32.totalorder %s563, 63
        %s565 = scalar_select %p564, %s563, 63
        %s566 = smul.addr %s565, 8
        %s567 = scalar_lea.vmem %s4, %s566
      $region48: #{upconv_forward.3} parent=43 // pred_fallthru
        _
    $region44: #{upconv_forward.3} parent=5 // pred_fallthru
      _
  $region6: #{upconv_forward.3} parent=0 // loop_footer
    %s14 = sadd.s32 1, %s10
  $region7: #{upconv_forward.3} parent=0 // loop_footer_branch
    %9 = sbr.rel target = $region3
  $region8: #{upconv_forward.3} parent=0 // loop_exit
    _

</llo_original>
